<compile_context>
chip_gen: v5e
topology: v5e:2x2
jax: 0.10.0
libtpu: 0.0.40
codegen_flags: <defaults>
</compile_context>

<pallas_src>
import functools
import math

import jax
import jax.numpy as jnp
from jax import lax
from jax.experimental import pallas as pl
from jax.experimental.pallas import tpu as pltpu


# ----------------------------------------------------------------------------
# small utils
# ----------------------------------------------------------------------------
def _round_up(x, m):
    return (x + m - 1) // m * m


def _choose_tk(k_dim):
    """Single k-step when small or un-tileable; else a 128/256-aligned divisor."""
    if k_dim <= 3072 or k_dim % 128 != 0:
        return k_dim                       # full-extent block (allowed)
    for t in range(2048, 255, -256):       # prefer 256-deep MXU alignment
        if k_dim % t == 0:
            return t
    for t in range(2048, 127, -128):
        if k_dim % t == 0:
            return t
    return k_dim


def _choose_tn(n_dim):
    if n_dim % 128 != 0:
        return n_dim                       # full-width single block (320 / 960)
    for t in (512, 384, 256, 128):
        if n_dim % t == 0:
            return t
    return 128


# ----------------------------------------------------------------------------
# Pallas kernel family: tiled matmul  Y = [LN](A) @ W + bias (+ residual)
#   bf16 inputs/weights/residual, f32 accumulator, bf16 output
# ----------------------------------------------------------------------------
def _mm_kernel_factory(has_ln, has_res, ln_eps):
    def kernel(*refs):
        a_ref, w_ref, b_ref = refs[0], refs[1], refs[2]
        idx = 3
        if has_ln:
            g_ref, bt_ref = refs[idx], refs[idx + 1]
            idx += 2
        if has_res:
            r_ref = refs[idx]
            idx += 1
        o_ref, acc_ref = refs[idx], refs[idx + 1]

        k = pl.program_id(2)

        @pl.when(k == 0)
        def _():
            acc_ref[...] = jnp.zeros_like(acc_ref)

        a = a_ref[...]
        if has_ln:
            # fused LayerNorm prologue (row-local; requires a single k-step)
            x = a.astype(jnp.float32)
            mu = jnp.mean(x, axis=-1, keepdims=True)
            var = jnp.mean(jnp.square(x - mu), axis=-1, keepdims=True)
            a = ((x - mu) * lax.rsqrt(var + ln_eps) * g_ref[...]
                 + bt_ref[...]).astype(jnp.bfloat16)

        acc_ref[...] += jnp.dot(a, w_ref[...],
                                preferred_element_type=jnp.float32)

        @pl.when(k == pl.num_programs(2) - 1)
        def _():
            out = acc_ref[...] + b_ref[...]
            if has_res:
                out = out + r_ref[...].astype(jnp.float32)
            o_ref[...] = out.astype(o_ref.dtype)

    return kernel


def matmul_bias(a, w, bias, residual=None, ln=None):
    """a: (M, K); w: (K, N) bf16 unpadded; bias: (N,) f32; ln=(gamma, beta, eps)."""
    M, K = a.shape
    N = w.shape[1]
    tm = min(128, _round_up(M, 16))
    Mp = _round_up(M, tm)
    tk = _choose_tk(K)
    tn = _choose_tn(N)
    if Mp // tm == 1 and N // tn == 1 and tm % 32 == 0:
        tm //= 2                       # >=2 parallel blocks so v7x uses both TCs

    a = a.astype(jnp.bfloat16)
    if Mp != M:
        a = jnp.pad(a, ((0, Mp - M), (0, 0)))
    bias2d = bias.astype(jnp.float32).reshape(1, N)

    in_specs = [pl.BlockSpec((tm, tk), lambda i, j, k: (i, k)),
                pl.BlockSpec((tk, tn), lambda i, j, k: (k, j)),
                pl.BlockSpec((1, tn), lambda i, j, k: (0, j))]
    args = [a, w, bias2d]
    if ln is not None:
        gamma, beta, eps = ln
        assert tk == K, "LayerNorm fusion needs the full row in one k-step"
        in_specs += [pl.BlockSpec((1, tk), lambda i, j, k: (0, k)),
                     pl.BlockSpec((1, tk), lambda i, j, k: (0, k))]
        args += [gamma.astype(jnp.float32).reshape(1, K),
                 beta.astype(jnp.float32).reshape(1, K)]
    if residual is not None:
        r = residual.astype(jnp.bfloat16)
        if Mp != M:
            r = jnp.pad(r, ((0, Mp - M), (0, 0)))
        in_specs.append(pl.BlockSpec((tm, tn), lambda i, j, k: (i, j)))
        args.append(r)

    kernel = _mm_kernel_factory(ln is not None, residual is not None,
                                ln[2] if ln is not None else 1e-5)
    out = pl.pallas_call(
        kernel,
        out_shape=jax.ShapeDtypeStruct((Mp, N), jnp.bfloat16),
        grid_spec=pltpu.PrefetchScalarGridSpec(
            num_scalar_prefetch=0,
            grid=(Mp // tm, N // tn, K // tk),
            in_specs=in_specs,
            out_specs=pl.BlockSpec((tm, tn), lambda i, j, k: (i, j)),
            scratch_shapes=[pltpu.VMEM((tm, tn), jnp.float32)]),
        compiler_params=pltpu.CompilerParams(
            dimension_semantics=("parallel", "parallel", "arbitrary")),
    )(*args)
    return out[:M] if Mp != M else out


# ----------------------------------------------------------------------------
# Pallas kernel: fused GeGLU matmul  out = (LN(A)@W1+b1) * gelu(LN(A)@W2+b2)
# ----------------------------------------------------------------------------
def _geglu_kernel_factory(has_ln, ln_eps):
    def kernel(a_ref, w1_ref, w2_ref, b1_ref, b2_ref, *rest):
        if has_ln:
            g_ref, bt_ref, o_ref, acc1, acc2 = rest
        else:
            o_ref, acc1, acc2 = rest

        k = pl.program_id(2)

        @pl.when(k == 0)
        def _():
            acc1[...] = jnp.zeros_like(acc1)
            acc2[...] = jnp.zeros_like(acc2)

        a = a_ref[...]
        if has_ln:
            x = a.astype(jnp.float32)
            mu = jnp.mean(x, axis=-1, keepdims=True)
            var = jnp.mean(jnp.square(x - mu), axis=-1, keepdims=True)
            a = ((x - mu) * lax.rsqrt(var + ln_eps) * g_ref[...]
                 + bt_ref[...]).astype(jnp.bfloat16)

        acc1[...] += jnp.dot(a, w1_ref[...], preferred_element_type=jnp.float32)
        acc2[...] += jnp.dot(a, w2_ref[...], preferred_element_type=jnp.float32)

        @pl.when(k == pl.num_programs(2) - 1)
        def _():
            xo = acc1[...] + b1_ref[...]
            g = acc2[...] + b2_ref[...]
            # TODO(synk): tanh GELU approximation; F.gelu default is the erf form.
            c = 0.7978845608028654  # sqrt(2/pi)
            gelu_g = 0.5 * g * (1.0 + jnp.tanh(c * (g + 0.044715 * g * g * g)))
            o_ref[...] = (xo * gelu_g).astype(o_ref.dtype)

    return kernel


def geglu_matmul(a, w1, b1, w2, b2, ln=None):
    M, K = a.shape
    N = w1.shape[1]
    tm = min(128, _round_up(M, 16))
    Mp = _round_up(M, tm)
    tk = _choose_tk(K)
    tn = _choose_tn(N)

    a = a.astype(jnp.bfloat16)
    if Mp != M:
        a = jnp.pad(a, ((0, Mp - M), (0, 0)))

    in_specs = [pl.BlockSpec((tm, tk), lambda i, j, k: (i, k)),
                pl.BlockSpec((tk, tn), lambda i, j, k: (k, j)),
                pl.BlockSpec((tk, tn), lambda i, j, k: (k, j)),
                pl.BlockSpec((1, tn), lambda i, j, k: (0, j)),
                pl.BlockSpec((1, tn), lambda i, j, k: (0, j))]
    args = [a, w1, w2,
            b1.astype(jnp.float32).reshape(1, N),
            b2.astype(jnp.float32).reshape(1, N)]
    if ln is not None:
        gamma, beta, eps = ln
        assert tk == K
        in_specs += [pl.BlockSpec((1, tk), lambda i, j, k: (0, k)),
                     pl.BlockSpec((1, tk), lambda i, j, k: (0, k))]
        args += [gamma.astype(jnp.float32).reshape(1, K),
                 beta.astype(jnp.float32).reshape(1, K)]

    kernel = _geglu_kernel_factory(ln is not None,
                                   ln[2] if ln is not None else 1e-5)
    out = pl.pallas_call(
        kernel,
        out_shape=jax.ShapeDtypeStruct((Mp, N), jnp.bfloat16),
        grid_spec=pltpu.PrefetchScalarGridSpec(
            num_scalar_prefetch=0,
            grid=(Mp // tm, N // tn, K // tk),
            in_specs=in_specs,
            out_specs=pl.BlockSpec((tm, tn), lambda i, j, k: (i, j)),
            scratch_shapes=[pltpu.VMEM((tm, tn), jnp.float32),
                            pltpu.VMEM((tm, tn), jnp.float32)]),
        compiler_params=pltpu.CompilerParams(
            dimension_semantics=("parallel", "parallel", "arbitrary")),
    )(*args)
    return out[:M] if Mp != M else out


# ----------------------------------------------------------------------------
# Pallas kernel: token-major GroupNorm (+ fused per-channel time-gate and SiLU)
#   group stats via a one-hot (C, G) matmul -> lane-dense, bf16 output
# ----------------------------------------------------------------------------
def _gn_kernel_factory(eps, silu, inv_cnt, has_scale):
    def kernel(*refs):
        if has_scale:
            x_ref, s_ref, gsel_ref, gselt_ref, gm_ref, bt_ref, o_ref = refs
        else:
            x_ref, gsel_ref, gselt_ref, gm_ref, bt_ref, o_ref = refs
        x = x_ref[0].astype(jnp.float32)                       # (HW, C)
        if has_scale:
            x = x * s_ref[0].astype(jnp.float32)               # (1, C) gate
        csum = jnp.sum(x, axis=0, keepdims=True)               # (1, C)
        csq = jnp.sum(x * x, axis=0, keepdims=True)            # (1, C)
        gsum = jnp.dot(csum, gsel_ref[...], preferred_element_type=jnp.float32)
        gsq = jnp.dot(csq, gsel_ref[...], preferred_element_type=jnp.float32)
        mean_g = gsum * inv_cnt
        var_g = jnp.maximum(gsq * inv_cnt - mean_g * mean_g, 0.0)
        rstd_g = lax.rsqrt(var_g + eps)
        mean_c = jnp.dot(mean_g, gselt_ref[...], preferred_element_type=jnp.float32)
        rstd_c = jnp.dot(rstd_g, gselt_ref[...], preferred_element_type=jnp.float32)
        y = (x - mean_c) * rstd_c * gm_ref[...] + bt_ref[...]
        if silu:
            y = y * (1.0 / (1.0 + jnp.exp(-y)))
        o_ref[0] = y.astype(o_ref.dtype)

    return kernel


def group_norm_tok(x_ntc, scale_n1c, gn_p, *, eps, silu):
    """x: (N, HW, C) token-major; scale: optional (N, 1, C) per-channel gate."""
    # TODO(synk): single-block-per-sample stats; tile HW (two-pass) for full-SD
    # resolutions so the block fits v7x's 64 MiB VMEM.
    N, HW, C = x_ntc.shape
    G = 32
    inv_cnt = 1.0 / float(HW * (C // G))
    has_scale = scale_n1c is not None

    in_specs = [pl.BlockSpec((1, HW, C), lambda n: (n, 0, 0))]
    args = [x_ntc]
    if has_scale:
        in_specs.append(pl.BlockSpec((1, 1, C), lambda n: (n, 0, 0)))
        args.append(scale_n1c)
    in_specs += [pl.BlockSpec((C, G), lambda n: (0, 0)),
                 pl.BlockSpec((G, C), lambda n: (0, 0)),
                 pl.BlockSpec((1, C), lambda n: (0, 0)),
                 pl.BlockSpec((1, C), lambda n: (0, 0))]
    args += [gn_p["gsel"], gn_p["gselt"],
             gn_p["g"].reshape(1, C), gn_p["b"].reshape(1, C)]

    return pl.pallas_call(
        _gn_kernel_factory(eps=eps, silu=silu, inv_cnt=inv_cnt,
                           has_scale=has_scale),
        out_shape=jax.ShapeDtypeStruct((N, HW, C), jnp.bfloat16),
        grid=(N,),
        in_specs=in_specs,
        out_specs=pl.BlockSpec((1, HW, C), lambda n: (n, 0, 0)),
        compiler_params=pltpu.CompilerParams(dimension_semantics=("parallel",)),
    )(*args)


# ----------------------------------------------------------------------------
# Pallas kernel: attention core  softmax(q k^T * scale) v, all heads per sample
#   bf16 MXU matmuls, f32 softmax statistics
# ----------------------------------------------------------------------------
def _attn_kernel(q_ref, k_ref, v_ref, o_ref, *, scale):
    q = q_ref[0]                                           # (H, T, d) bf16
    k = k_ref[0]                                           # (H, S, d) bf16
    v = v_ref[0]                                           # (H, S, d) bf16
    s = jnp.einsum('htd,hsd->hts', q, k,
                   preferred_element_type=jnp.float32) * scale
    m = jnp.max(s, axis=-1, keepdims=True)
    p = jnp.exp(s - m)
    denom = jnp.sum(p, axis=-1, keepdims=True)
    p = (p * pl.reciprocal(denom, approx=True)).astype(jnp.bfloat16)
    o_ref[0] = jnp.einsum('hts,hsd->htd', p, v,
                          preferred_element_type=jnp.float32).astype(o_ref.dtype)


def attention_core(q, k, v, scale):
    # TODO(synk): head dim 40/80/160 underfills MXU depth; pad d to 128 / go
    # flash-style tiling over S before scaling to real SD resolutions.
    N, Hh, T, d = q.shape
    S = k.shape[2]
    return pl.pallas_call(
        functools.partial(_attn_kernel, scale=scale),
        out_shape=jax.ShapeDtypeStruct((N, Hh, T, d), jnp.bfloat16),
        grid=(N,),
        in_specs=[pl.BlockSpec((1, Hh, T, d), lambda n: (n, 0, 0, 0)),
                  pl.BlockSpec((1, Hh, S, d), lambda n: (n, 0, 0, 0)),
                  pl.BlockSpec((1, Hh, S, d), lambda n: (n, 0, 0, 0))],
        out_specs=pl.BlockSpec((1, Hh, T, d), lambda n: (n, 0, 0, 0)),
        compiler_params=pltpu.CompilerParams(dimension_semantics=("parallel",)),
    )(q, k, v)


# ----------------------------------------------------------------------------
# Pallas kernel: SiLU (used once per forward on the time embedding)
# ----------------------------------------------------------------------------
def _silu_kernel(x_ref, o_ref):
    x = x_ref[...].astype(jnp.float32)
    o_ref[...] = (x * (1.0 / (1.0 + jnp.exp(-x)))).astype(o_ref.dtype)


def silu2d(x2d):
    M, C = x2d.shape
    return pl.pallas_call(
        _silu_kernel,
        out_shape=jax.ShapeDtypeStruct((M, C), jnp.bfloat16),
        grid=(1,),
        in_specs=[pl.BlockSpec((M, C), lambda i: (0, 0))],
        out_specs=pl.BlockSpec((M, C), lambda i: (0, 0)),
    )(x2d)


# ----------------------------------------------------------------------------
# Convolutions (NHWC token-major, matmul in Pallas)
# ----------------------------------------------------------------------------
def conv3x3(x, w, bias, stride=1, residual=None):
    """x: (N, H, W, Cin) NHWC; w: (Cin*9, Cout) bf16 im2col-layout weight."""
    N, H, W, Cin = x.shape
    x = x.astype(jnp.bfloat16)
    xp = jnp.pad(x, ((0, 0), (1, 1), (1, 1), (0, 0)))
    Ho = (H + 2 - 3) // stride + 1
    Wo = (W + 2 - 3) // stride + 1
    taps = []
    for dy in range(3):
        for dx in range(3):
            taps.append(xp[:, dy:dy + stride * (Ho - 1) + 1:stride,
                           dx:dx + stride * (Wo - 1) + 1:stride, :])
    # TODO(synk): im2col still materializes 9x activation (now bf16); fold the
    # taps into the matmul's k-axis index_map for large spatial resolutions.
    patches = jnp.concatenate(taps, axis=-1).reshape(N * Ho * Wo, Cin * 9)
    r = residual.reshape(N * Ho * Wo, -1) if residual is not None else None
    y = matmul_bias(patches, w, bias, residual=r)
    return y.reshape(N, Ho, Wo, -1)


def conv1x1(x, w, bias, residual=None):
    N, H, W, Cin = x.shape
    r = residual.reshape(N * H * W, -1) if residual is not None else None
    y = matmul_bias(x.reshape(N * H * W, Cin), w, bias, residual=r)
    return y.reshape(N, H, W, -1)


# ----------------------------------------------------------------------------
# Parameter initialization (deterministic, synthetic, bf16, unpadded layouts)
# ----------------------------------------------------------------------------
class Init:
    def __init__(self, key):
        self.key = key
        self.count = 0

    def normal(self, shape, scale=0.02):
        self.count += 1
        k = jax.random.fold_in(self.key, self.count)
        return jax.random.normal(k, shape, jnp.bfloat16) * scale


def init_linear(init, din, dout, bias=True):
    # bias kept zero when the layer has no bias (adding zero is equivalent).
    del bias
    return {"w": init.normal((din, dout)), "b": jnp.zeros((dout,), jnp.float32)}


def init_conv(init, cin, cout, k):
    # weight stored as an im2col-ready (Cin*k*k, Cout) bf16 matrix.
    return init_linear(init, cin * k * k, cout)


def init_norm(init, c):
    return {"g": jnp.ones((c,), jnp.float32), "b": jnp.zeros((c,), jnp.float32)}


def init_groupnorm(init, c, groups=32):
    cg = c // groups
    gsel = jnp.repeat(jnp.eye(groups, dtype=jnp.float32), cg, axis=0)   # (C, G)
    return {"g": jnp.ones((c,), jnp.float32),
            "b": jnp.zeros((c,), jnp.float32),
            "gsel": gsel, "gselt": gsel.T}


def init_resblock(init, cin, cout, n_time=1280):
    p = {"gn_feat": init_groupnorm(init, cin),
         "conv_feat": init_conv(init, cin, cout, 3),
         "lin_time": init_linear(init, n_time, cout),
         "gn_merged": init_groupnorm(init, cout),
         "conv_merged": init_conv(init, cout, cout, 3)}
    if cin != cout:
        p["res_conv"] = init_conv(init, cin, cout, 1)
    return p


def init_attnblock(init, n_head, n_embed, d_context=768):
    c = n_head * n_embed
    return {"gn": init_groupnorm(init, c),
            "conv_in": init_conv(init, c, c, 1),
            "ln1": init_norm(init, c),
            "attn1_in": init_linear(init, c, 3 * c, bias=False),
            "attn1_out": init_linear(init, c, c),
            "ln2": init_norm(init, c),
            "attn2_q": init_linear(init, c, c, bias=False),
            "attn2_k": init_linear(init, d_context, c, bias=False),
            "attn2_v": init_linear(init, d_context, c, bias=False),
            "attn2_out": init_linear(init, c, c),
            "ln3": init_norm(init, c),
            "geglu_x": init_linear(init, c, 4 * c),
            "geglu_g": init_linear(init, c, 4 * c),
            "geglu2": init_linear(init, 4 * c, c),
            "conv_out": init_conv(init, c, c, 1)}


def build_unet(key):
    init = Init(key)

    def conv(cin, cout, stride=1):
        return ("conv", stride), init_conv(init, cin, cout, 3)

    def res(cin, cout):
        return ("res",), init_resblock(init, cin, cout)

    def attn(nh, ne):
        return ("attn", nh), init_attnblock(init, nh, ne)

    def up(c):
        return ("up",), init_conv(init, c, c, 3)

    def seq(*layers):
        return tuple(l[0] for l in layers), [l[1] for l in layers]

    enc = [seq(conv(4, 320)),
           seq(res(320, 320), attn(8, 40)),
           seq(res(320, 320), attn(8, 40)),
           seq(conv(320, 320, stride=2)),
           seq(res(320, 640), attn(8, 80)),
           seq(res(640, 640), attn(8, 80)),
           seq(conv(640, 640, stride=2)),
           seq(res(640, 1280), attn(8, 160)),
           seq(res(1280, 1280), attn(8, 160)),
           seq(conv(1280, 1280, stride=2)),
           seq(res(1280, 1280)),
           seq(res(1280, 1280))]
    bot = seq(res(1280, 1280), attn(8, 160), res(1280, 1280))
    dec = [seq(res(2560, 1280)),
           seq(res(2560, 1280)),
           seq(res(2560, 1280), up(1280)),
           seq(res(2560, 1280), attn(8, 160)),
           seq(res(2560, 1280), attn(8, 160)),
           seq(res(1920, 1280), attn(8, 160), up(1280)),
           seq(res(1920, 640), attn(8, 80)),
           seq(res(1280, 640), attn(8, 80)),
           seq(res(960, 640), attn(8, 80), up(640)),
           seq(res(960, 320), attn(8, 40)),
           # TODO(synk): source says UNET_AttentionBlock(8, 80) here, which is
           # inconsistent with the 320-channel residual output; using (8, 40).
           seq(res(640, 320), attn(8, 40)),
           seq(res(640, 320), attn(8, 40))]

    arch = {"enc": [e[0] for e in enc], "bot": bot[0], "dec": [d[0] for d in dec]}
    params = ([e[1] for e in enc], bot[1], [d[1] for d in dec])
    return arch, params


# ----------------------------------------------------------------------------
# Blocks (activations NHWC / token-major bf16)
# ----------------------------------------------------------------------------
def apply_resblock(p, feature, time_silu):
    """feature: (N, H, W, Cin); time_silu: (N, 1280) already SiLU'ed."""
    N, H, W, Cin = feature.shape
    f = group_norm_tok(feature.reshape(N, H * W, Cin), None, p["gn_feat"],
                       eps=1e-5, silu=True)                        # GN+SiLU fused
    f = conv3x3(f.reshape(N, H, W, Cin), p["conv_feat"]["w"], p["conv_feat"]["b"])
    t = matmul_bias(time_silu, p["lin_time"]["w"], p["lin_time"]["b"])  # (N, Cout)
    Cout = t.shape[1]
    # TODO(synk): reference code multiplies feature by time (canonical SD adds);
    # the gate is fused into the merged GroupNorm kernel below.
    merged = group_norm_tok(f.reshape(N, H * W, Cout), t.reshape(N, 1, Cout),
                            p["gn_merged"], eps=1e-5, silu=True)
    if "res_conv" in p:
        res = conv1x1(feature, p["res_conv"]["w"], p["res_conv"]["b"])
    else:
        res = feature
    return conv3x3(merged.reshape(N, H, W, Cout),
                   p["conv_merged"]["w"], p["conv_merged"]["b"],
                   residual=res)                                   # residual fused


def _split_heads(a2d, N, S, n_head, d):
    return a2d.reshape(N, S, n_head, d).transpose(0, 2, 1, 3)      # (N, H, S, d)


def self_attention(p, a2d, N, T, C, n_head):
    """a2d is the PRE-LayerNorm activation; LN1 is fused into the QKV matmul."""
    d = C // n_head
    qkv = matmul_bias(a2d, p["attn1_in"]["w"], p["attn1_in"]["b"],
                      ln=(p["ln1"]["g"], p["ln1"]["b"], 1e-5))
    q = _split_heads(qkv[:, :C], N, T, n_head, d)
    k = _split_heads(qkv[:, C:2 * C], N, T, n_head, d)
    v = _split_heads(qkv[:, 2 * C:], N, T, n_head, d)
    o = attention_core(q, k, v, 1.0 / math.sqrt(d))
    o = o.transpose(0, 2, 1, 3).reshape(N * T, C)
    return matmul_bias(o, p["attn1_out"]["w"], p["attn1_out"]["b"],
                       residual=a2d)


def cross_attention(p, a2d, context, N, T, C, n_head):
    """a2d is the PRE-LayerNorm activation; LN2 is fused into the Q matmul."""
    d = C // n_head
    S = context.shape[1]
    ctx2d = context.reshape(N * S, context.shape[2]).astype(jnp.bfloat16)
    q = _split_heads(matmul_bias(a2d, p["attn2_q"]["w"], p["attn2_q"]["b"],
                                 ln=(p["ln2"]["g"], p["ln2"]["b"], 1e-5)),
                     N, T, n_head, d)
    k = _split_heads(matmul_bias(ctx2d, p["attn2_k"]["w"], p["attn2_k"]["b"]),
                     N, S, n_head, d)
    v = _split_heads(matmul_bias(ctx2d, p["attn2_v"]["w"], p["attn2_v"]["b"]),
                     N, S, n_head, d)
    o = attention_core(q, k, v, 1.0 / math.sqrt(d))
    o = o.transpose(0, 2, 1, 3).reshape(N * T, C)
    return matmul_bias(o, p["attn2_out"]["w"], p["attn2_out"]["b"],
                       residual=a2d)


def apply_attnblock(p, x, context, n_head=8):
    # TODO(synk): source omits layernorm_1 and discards attention outputs;
    # the intended transformer-block semantics are implemented.
    N, H, W, C = x.shape
    T = H * W
    residue_long = x.reshape(N * T, C)
    h = group_norm_tok(x.reshape(N, T, C), None, p["gn"], eps=1e-6, silu=False)
    t2d = matmul_bias(h.reshape(N * T, C), p["conv_in"]["w"], p["conv_in"]["b"])

    y = self_attention(p, t2d, N, T, C, n_head)                     # LN1 fused
    z = cross_attention(p, y, context, N, T, C, n_head)             # LN2 fused
    u = geglu_matmul(z, p["geglu_x"]["w"], p["geglu_x"]["b"],
                     p["geglu_g"]["w"], p["geglu_g"]["b"],
                     ln=(p["ln3"]["g"], p["ln3"]["b"], 1e-5))        # LN3+GeGLU
    z2 = matmul_bias(u, p["geglu2"]["w"], p["geglu2"]["b"], residual=z)

    out = matmul_bias(z2, p["conv_out"]["w"], p["conv_out"]["b"],
                      residual=residue_long)                        # 1x1 + residual
    return out.reshape(N, H, W, C)


def apply_upsample(p, x):
    # TODO(synk): fold nearest-2x upsample into the conv's input indexing for
    # large resolutions instead of materializing the 4x (bf16) activation.
    x = jnp.repeat(jnp.repeat(x, 2, axis=1), 2, axis=2)
    return conv3x3(x, p["w"], p["b"])


def _conv_layer(p, x, stride):
    return conv3x3(x, p["w"], p["b"], stride=stride)


# Block-level jit: identical block configurations share one compiled module.
_res_fn = jax.jit(apply_resblock)
_attn_fn = jax.jit(apply_attnblock, static_argnames=("n_head",))
_up_fn = jax.jit(apply_upsample)
_conv_fn = jax.jit(_conv_layer, static_argnames=("stride",))
_silu_fn = jax.jit(silu2d)


def apply_seq(kinds, ps, x, context, time_silu):
    for kind, p in zip(kinds, ps):
        if kind[0] == "res":
            x = _res_fn(p, x, time_silu)
        elif kind[0] == "attn":
            x = _attn_fn(p, x, context, n_head=kind[1])
        elif kind[0] == "conv":
            x = _conv_fn(p, x, stride=kind[1])
        elif kind[0] == "up":
            x = _up_fn(p, x)
    return x


# ----------------------------------------------------------------------------
# UNET forward (standard skip-connection forward implied by the architecture)
# ----------------------------------------------------------------------------
def unet_forward(arch, params, latent_nchw, context, time_emb):
    enc_p, bot_p, dec_p = params
    x = jnp.transpose(latent_nchw, (0, 2, 3, 1))        # NCHW -> NHWC once
    t_silu = _silu_fn(time_emb)                         # SiLU(time) computed once
    skips = []
    for kinds, ps in zip(arch["enc"], enc_p):
        x = apply_seq(kinds, ps, x, context, t_silu)
        skips.append(x)
    x = apply_seq(arch["bot"], bot_p, x, context, t_silu)
    for kinds, ps in zip(arch["dec"], dec_p):
        x = jnp.concatenate([x, skips.pop()], axis=-1)  # bf16 skip concat
        x = apply_seq(kinds, ps, x, context, t_silu)
    return jnp.transpose(x, (0, 3, 1, 2)).astype(jnp.float32)   # back to NCHW


# ----------------------------------------------------------------------------
# main
# ----------------------------------------------------------------------------
if __name__ == "__main__":
    root = jax.random.PRNGKey(0)
    arch, params = build_unet(jax.random.fold_in(root, 1))

    k_lat, k_ctx, k_time = jax.random.split(jax.random.fold_in(root, 2), 3)
    # Small input shapes consistent with the module:
    #   latent (N, 4, H, W), context (N, S, 768), time-embedding (N, 1280)
    latent = jax.random.normal(k_lat, (2, 4, 8, 8), jnp.float32)
    context = jax.random.normal(k_ctx, (2, 8, 768), jnp.float32)
    time_emb = jax.random.normal(k_time, (2, 1280), jnp.float32)

    out = unet_forward(arch, params, latent, context, time_emb)
    out = jax.block_until_ready(out)

    assert out.shape == (2, 320, 8, 8), out.shape
    assert bool(jnp.all(jnp.isfinite(out)))
    print("KERNEL_OK")
</pallas_src>

<mosaic_0001>
module attributes {stable_mosaic.version = 11 : i64} {
  func.func @_silu_kernel(%arg0: i32, %arg1: memref<2x1280xf32, #tpu.memory_space<vmem>>, %arg2: memref<2x1280xbf16, #tpu.memory_space<vmem>>) attributes {dimension_semantics = [#tpu.dimension_semantics<arbitrary>], iteration_bounds = array<i64: 1>, scalar_prefetch = 0 : i64, scratch_operands = 0 : i64, tpu.core_type = #tpu.core_type<tc>, window_params = [{pipeline_mode = #tpu.pipeline_mode<synchronous>, transform_indices = @transform_0, window_bounds = array<i64: 2, 1280>}, {pipeline_mode = #tpu.pipeline_mode<synchronous>, transform_indices = @transform_1, window_bounds = array<i64: 2, 1280>}]} {
    %c0 = arith.constant 0 : index
    %c0_0 = arith.constant 0 : index
    %0 = vector.load %arg1[%c0, %c0_0] : memref<2x1280xf32, #tpu.memory_space<vmem>>, vector<2x1280xf32>
    %cst = arith.constant 0.000000e+00 : f32
    %1 = vector.broadcast %cst : f32 to vector<2x1280xf32>
    %2 = arith.subf %1, %0 : vector<2x1280xf32>
    %3 = math.exp %2 : vector<2x1280xf32>
    %cst_1 = arith.constant 1.000000e+00 : f32
    %4 = vector.broadcast %cst_1 : f32 to vector<2x1280xf32>
    %5 = arith.addf %4, %3 : vector<2x1280xf32>
    %cst_2 = arith.constant 1.000000e+00 : f32
    %6 = vector.broadcast %cst_2 : f32 to vector<2x1280xf32>
    %7 = arith.divf %6, %5 : vector<2x1280xf32>
    %8 = arith.mulf %0, %7 : vector<2x1280xf32>
    %9 = arith.truncf %8 : vector<2x1280xf32> to vector<2x1280xbf16>
    %c0_3 = arith.constant 0 : index
    %c0_4 = arith.constant 0 : index
    %10 = vector.load %arg2[%c0_3, %c0_4] : memref<2x1280xbf16, #tpu.memory_space<vmem>>, vector<2x1280xbf16>
    tpu.vector_store %arg2[%c0_3, %c0_4], %9 {strides = array<i32>} : memref<2x1280xbf16, #tpu.memory_space<vmem>>, vector<2x1280xbf16>,
    return
  }
  func.func @transform_0(%arg0: i32) -> (i32, i32) {
    %c0_i32 = arith.constant 0 : i32
    %c0_i32_0 = arith.constant 0 : i32
    %c0_i32_1 = arith.constant 0 : i32
    return %c0_i32, %c0_i32_0 : i32, i32
  }
  func.func @transform_1(%arg0: i32) -> (i32, i32) {
    %c0_i32 = arith.constant 0 : i32
    %c0_i32_0 = arith.constant 0 : i32
    %c0_i32_1 = arith.constant 0 : i32
    return %c0_i32, %c0_i32_0 : i32, i32
  }
}

</mosaic_0001>

<llo_original>
// kernel: silu2d.1
$region0: #{silu2d.1}
  #allocation0 [shape = 'u32[]', space=smem, size = 0x4, offset = 0x4, fixed_abs, tag = 'smem constant byte address 0x4 - core index']
  #allocation1 [shape = 'u32[72,128]{1,0:T(1,128)}', space=vmem, size = 0x9000, scoped, tag = 'internal scratch']
  %s0 = inlined_call_operand.hbm [shape: f32[2,1280], index: 0, kind: input, shape index: {}]
  %s1 = inlined_call_operand.hbm [shape: bf16[2,1280], index: 1, kind: output, shape index: {}]
  %s2 = sld [smem:[#allocation0]]
  $region18: #{silu2d.1} parent=0
    _
  %s4 = ssub.s32 1, %s2
  %s5 = scalar_select 0, %s4, %s2
  $region1: #{silu2d.1} parent=0
    #allocation2 [shape = 'u8[10240]{0}', space=vmem, size = 0x2800, scoped, tag = 'input window, operand 0, single buffered']
    #allocation3 [shape = 's32[1]{0}', space=sflag, size = 0x4, scoped, tag = 'scoped memory for silu2d.1']
    #allocation4 [shape = 's32[1]{0}', space=sflag, size = 0x4, scoped, tag = 'scoped memory for silu2d.1']
    #allocation5 [shape = 'u8[5120]{0}', space=vmem, size = 0x1400, scoped, tag = 'output window, operand 0, single buffered']
    %6 = vsyncpa [#allocation3], 0
    %7 = vsyncpa [#allocation4], 0
    // Predicated region
    $region2: #{silu2d.1} parent=1 // pred_check
      _
    $region3: #{silu2d.1} parent=1 // pred_check_branch
      %9 = sbr.rel (0) target = $region5
    $region4: #{silu2d.1} parent=1 // pred_region
      %11 = vsyncadd [#allocation3], 0
      %s13 = sshll.u32 %s0, 4
      %s14 = int_to_ptr.hbm [resolvable:$true] %s13
      %s15 = sshll.u32 [#allocation2], 4
      %s16 = int_to_ptr.vmem [resolvable:$true] %s15
      %18 = dma.hbm_to_vmem [thread:$0]  %s14, 320, %s16, [#allocation3]
    $region5: #{silu2d.1} parent=1 // pred_fallthru
      _
    // Predicated region
    $region6: #{silu2d.1} parent=1 // pred_check
      _
    $region7: #{silu2d.1} parent=1 // pred_check_branch
      %20 = sbr.rel (0) target = $region9
    $region8: #{silu2d.1} parent=1 // pred_region
      %22 = dma.done [#allocation3], 320
    $region9: #{silu2d.1} parent=1 // pred_fallthru
      _
    %v23 = vld [vmem:[#allocation2] sm:$0xff]
    %v24 = vld [vmem:[#allocation2 + $0x8] sm:$0xff]
    %v25 = vld [vmem:[#allocation2 + $0x10] sm:$0xf]
    %v26 = vsub.f32 0.0, %v23
    %v27 = vsub.f32 0.0, %v24
    %v28 = vsub.f32 0.0, %v25
    %v29 = vmul.f32 %v26, 1.442695
    %v30 = vpow.pop %v29
    %v31 = vmul.f32 %v27, 1.442695
    %v32 = vpow.pop %v31
    %v33 = vmul.f32 %v28, 1.442695
    %v34 = vpow.pop %v33
    %v35 = vadd.f32 %v30, 1.0
    %v36 = vadd.f32 %v32, 1.0
    %v37 = vadd.f32 %v34, 1.0
    %v38 = vrcp.pop %v35
    %v39 = vmul.f32 %v35, %v38
    %v40 = vsub.f32 1.0, %v39
    %v41 = vmul.f32 %v38, %v40
    %v42 = vadd.f32 %v38, %v41
    %vm43 = vweird.f32 %v35
    %vm44 = vweird.f32 %v38
    %vm45 = vmor %vm43, %vm44
    %v46 = vsel %vm45, %v38, %v42
    %v47 = vand.u32 2147483647, %v35
    %vm48 = vcmp.eq.f32.partialorder %v47, 8.507059e+37
    %v49 = vand.u32 %v35, 2147483648
    %v50 = vor.u32 1.1754944e-38, %v49
    %v51 = vsel %vm48, %v50, %v46
    %v52 = vmul.f32 1.0, %v51
    %v53 = vrcp.pop %v36
    %v54 = vmul.f32 %v36, %v53
    %v55 = vsub.f32 1.0, %v54
    %v56 = vmul.f32 %v53, %v55
    %v57 = vadd.f32 %v53, %v56
    %vm58 = vweird.f32 %v36
    %vm59 = vweird.f32 %v53
    %vm60 = vmor %vm58, %vm59
    %v61 = vsel %vm60, %v53, %v57
    %v62 = vand.u32 2147483647, %v36
    %vm63 = vcmp.eq.f32.partialorder %v62, 8.507059e+37
    %v64 = vand.u32 %v36, 2147483648
    %v65 = vor.u32 1.1754944e-38, %v64
    %v66 = vsel %vm63, %v65, %v61
    %v67 = vmul.f32 1.0, %v66
    %v68 = vrcp.pop %v37
    %v69 = vmul.f32 %v37, %v68
    %v70 = vsub.f32 1.0, %v69
    %v71 = vmul.f32 %v68, %v70
    %v72 = vadd.f32 %v68, %v71
    %vm73 = vweird.f32 %v37
    %vm74 = vweird.f32 %v68
    %vm75 = vmor %vm73, %vm74
    %v76 = vsel %vm75, %v68, %v72
    %v77 = vand.u32 2147483647, %v37
    %vm78 = vcmp.eq.f32.partialorder %v77, 8.507059e+37
    %v79 = vand.u32 %v37, 2147483648
    %v80 = vor.u32 1.1754944e-38, %v79
    %v81 = vsel %vm78, %v80, %v76
    %v82 = vmul.f32 1.0, %v81
    %v83 = vmul.f32 %v23, %v52
    %v84 = vmul.f32 %v24, %v67
    %v85 = vmul.f32 %v25, %v82
    %89 = vst [vmem:[#allocation1] ss:$4 sm:$0xff] %v83
    %s90 = scalar_lea.vmem [#allocation1], 32
    %91 = vst [vmem:[%s90] ss:$4 sm:$0xff] %v84
    %v92 = vld.sshfl [vmem:[#allocation1] sm:$0xff pattern:$0x73625140]
    %v93 = vld.sshfl [vmem:[#allocation1 + $0x8] sm:$0xff pattern:$0x73625140]
    %v94 = vld.sshfl [vmem:[#allocation1 + $0x10] sm:$0xff pattern:$0x73625140]
    %v95 = vld.sshfl [vmem:[#allocation1 + $0x18] sm:$0xff pattern:$0x73625140]
    %v96 = vld.sshfl [vmem:[#allocation1 + $0x20] sm:$0xff pattern:$0x73625140]
    %v97 = vld.sshfl [vmem:[#allocation1 + $0x28] sm:$0xff pattern:$0x73625140]
    %v98 = vld.sshfl [vmem:[#allocation1 + $0x30] sm:$0xff pattern:$0x73625140]
    %v99 = vld.sshfl [vmem:[#allocation1 + $0x38] sm:$0xff pattern:$0x73625140]
    %100 = vst [vmem:[#allocation1] ss:$4 sm:$0xff] %v85
    %v101 = vld.sshfl [vmem:[#allocation1] sm:$0xff pattern:$0x73625140]
    %v102 = vld.sshfl [vmem:[#allocation1 + $0x8] sm:$0xff pattern:$0x73625140]
    %v113 = vpack.c.bf16 %v93, %v92
    %v114 = vpack.c.bf16 %v95, %v94
    %v115 = vpack.c.bf16 %v97, %v96
    %v116 = vpack.c.bf16 %v99, %v98
    %v117 = vpack.c.bf16 %v102, %v101
    %v123 = vrot.slane %v113, 3
    %v124 = vrot.slane %v114, 6
    %v125 = vrot.slane %v114, 1
    %v126 = vrot.slane %v115, 4
    %v127 = vrot.slane %v115, 7
    %v128 = vrot.slane %v116, 2
    %v129 = vrot.slane %v116, 5
    %v130 = vrot.slane %v117, 3
    %vm131 = vcmask 1040384
    %v134 = vsel %vm131, %v113, %v123
    %vm135 = vcmask 1042434
    %v138 = vsel %vm135, %v124, %v125
    %vm139 = vcmask 1041408
    %v140 = vsel %vm139, %v134, %v138
    %vm141 = vcmask 1044484
    %v144 = vsel %vm141, %v126, %v127
    %vm145 = vcmask 1046534
    %v148 = vsel %vm145, %v128, %v129
    %vm149 = vcmask 1045508
    %v150 = vsel %vm149, %v144, %v148
    %vm151 = vcmask 1043456
    %v152 = vsel %vm151, %v140, %v150
    %v155 = vsel %vm131, %v117, %v130
    %158 = vst [vmem:[#allocation5] sm:$0xff] %v152
    %159 = vst [vmem:[#allocation5 + $0x8] sm:$0x3] %v155
    // Predicated region
    $region10: #{silu2d.1} parent=1 // pred_check
      _
    $region11: #{silu2d.1} parent=1 // pred_check_branch
      %161 = sbr.rel (0) target = $region13
    $region12: #{silu2d.1} parent=1 // pred_region
      %163 = vsyncadd [#allocation4], 0
      %s165 = sshll.u32 [#allocation5], 4
      %s166 = int_to_ptr.vmem [resolvable:$true] %s165
      %s167 = sshll.u32 %s1, 4
      %s168 = int_to_ptr.hbm [resolvable:$true] %s167
      %170 = dma.vmem_to_hbm [thread:$0]  %s166, 160, %s168, [#allocation4]
    $region13: #{silu2d.1} parent=1 // pred_fallthru
      _
    // Predicated region
    $region14: #{silu2d.1} parent=1 // pred_check
      _
    $region15: #{silu2d.1} parent=1 // pred_check_branch
      %172 = sbr.rel (0) target = $region17
    $region16: #{silu2d.1} parent=1 // pred_region
      %174 = dma.done [#allocation4], 160
    $region17: #{silu2d.1} parent=1 // pred_fallthru
      _
    %175 = vsyncpa [#allocation3], 1
    %176 = vsyncpa [#allocation4], 1

</llo_original>
